<compile_context>
chip_gen: v6e
topology: v6e:2x2x1
jax: 0.10.0
libtpu: 0.0.40
codegen_flags: <defaults>
</compile_context>

<pallas_src>
import functools

import jax
import jax.numpy as jnp
from jax import lax
from jax.experimental import pallas as pl
from jax.experimental.pallas import tpu as pltpu


def dsc2d_forward(x, y, w_dw, w_pw, *, stride, padding,
                  compute_dtype=jnp.bfloat16, batch_block=None):
    """x: (N, Cin, H, W), y: (N, Cy, Hout, Wout),
    w_dw: (Cin, 1, KH, KW) depthwise weight, w_pw: (Cout, Cin, 1, 1) pointwise."""
    N, Cin, H, W = x.shape
    Cout = w_pw.shape[0]
    KH, KW = w_dw.shape[2], w_dw.shape[3]
    Hp, Wp = H + 2 * padding, W + 2 * padding
    Hout = (Hp - KH) // stride + 1
    Wout = (Wp - KW) // stride + 1
    assert (Hout - 1) * stride + KH <= Hp and (Wout - 1) * stride + KW <= Wp

    # Channel padding so im2col scratch rows are sublane-tile aligned.
    sub = 8 * (4 // jnp.dtype(compute_dtype).itemsize)   # 8 for f32, 16 for bf16
    Cin_p = -(-Cin // sub) * sub
    Ktot = KH * KW * Cin_p

    # Dense output columns the kernel computes: Hsel full padded rows of width
    # Wp (lane-dense); wrapper drops wrap-around columns / decimates afterwards.
    Hsel = (Hout - 1) * stride + 1
    Lout = Hsel * Wp
    # Flat input length so every tap slice [kh*Wp+kw : +Lout] is in bounds.
    extra_rows = -(-(KW - 1) // Wp) if KW > 1 else 0
    L = (Hp + extra_rows) * Wp

    # Batch block: keep >= 2 grid steps (v7x has 2 TensorCores per chip).
    if batch_block is None:
        batch_block = 1
        for cand in (8, 4, 2):
            if N % cand == 0 and N // cand >= 2:
                batch_block = cand
                break
    bn = batch_block
    assert N % bn == 0

    # --- wrapper glue: one fused pad (channels + spatial + tail rows), then a
    # cheap flatten of spatial.  No transposes anywhere. ---
    xq = jnp.pad(x.astype(compute_dtype),
                 ((0, 0), (0, Cin_p - Cin),
                  (padding, padding + extra_rows), (padding, padding)))
    xf = xq.reshape(N, Cin_p, L)

    # Fused depthwise*pointwise weight: wf[o, (kh*KW + kw)*Cin_p + c].
    wdw = jnp.transpose(w_dw[:, 0, :, :], (1, 2, 0))      # (KH, KW, Cin)
    wpw = w_pw[:, :, 0, 0]                                # (Cout, Cin)
    wf = wpw[:, None, None, :] * wdw[None, :, :, :]       # (Cout, KH, KW, Cin)
    wf = jnp.pad(wf, ((0, 0), (0, 0), (0, 0), (0, Cin_p - Cin)))
    wf = wf.reshape(Cout, Ktot).astype(compute_dtype)

    taps = [(kh, kw) for kh in range(KH) for kw in range(KW)]

    def kernel(x_ref, wf_ref, o_ref, patch_ref):
        # x_ref:     (bn, Cin_p, L)     flattened, padded activations (bf16)
        # wf_ref:    (Cout, Ktot)       fused depthwise*pointwise weight (bf16)
        # o_ref:     (bn, Cout, Lout)   lane-dense output (f32)
        # patch_ref: (Ktot, Lout)       VMEM im2col scratch (bf16)
        w = wf_ref[...]
        for b in range(bn):                               # static unroll
            xb = x_ref[b]                                 # (Cin_p, L)
            for t, (kh, kw) in enumerate(taps):
                off = kh * Wp + kw                        # static lane offset
                patch_ref[t * Cin_p:(t + 1) * Cin_p, :] = xb[:, off:off + Lout]
            acc = jnp.dot(w, patch_ref[...],
                          preferred_element_type=jnp.float32)
            o_ref[b] = acc.astype(o_ref.dtype)

    out_flat = pl.pallas_call(
        kernel,
        out_shape=jax.ShapeDtypeStruct((N, Cout, Lout), jnp.float32),
        grid=(N // bn,),
        in_specs=[
            pl.BlockSpec((bn, Cin_p, L), lambda i: (i, 0, 0)),
            pl.BlockSpec((Cout, Ktot), lambda i: (0, 0)),
        ],
        out_specs=pl.BlockSpec((bn, Cout, Lout), lambda i: (i, 0, 0)),
        scratch_shapes=[pltpu.VMEM((Ktot, Lout), compute_dtype)],
        compiler_params=pltpu.CompilerParams(dimension_semantics=("parallel",)),
    )(xf, wf)

    # Drop wrap-around columns / decimate by stride -> NCHW output directly.
    out = out_flat.reshape(N, Cout, Hsel, Wp)
    out = out[:, :, ::stride, 0:(Wout - 1) * stride + 1:stride]
    out = out.astype(x.dtype)
    cat = jnp.concatenate([out, y], axis=1)               # torch.cat dim=1
    return out, cat


def _reference_forward(x, y, w_dw, w_pw, *, stride, padding):
    """Pure-JAX reference (lax.conv) used for a correctness check."""
    Cin = x.shape[1]
    dn1 = lax.conv_dimension_numbers(x.shape, w_dw.shape, ("NCHW", "OIHW", "NCHW"))
    dw = lax.conv_general_dilated(
        x, w_dw, (stride, stride), [(padding, padding), (padding, padding)],
        dimension_numbers=dn1, feature_group_count=Cin)
    dn2 = lax.conv_dimension_numbers(dw.shape, w_pw.shape, ("NCHW", "OIHW", "NCHW"))
    out = lax.conv_general_dilated(dw, w_pw, (1, 1), "VALID", dimension_numbers=dn2)
    cat = jnp.concatenate([out, y], axis=1)
    return out, cat


if __name__ == "__main__":
    # Small deterministic problem: DSC2d(in_ch=4, out_ch=8, kernel=3, stride=1, padding=1)
    N, Cin, H, W = 2, 4, 16, 16
    Cout, K, stride, padding = 8, 3, 1, 1
    Cy = 4  # channels of the second input `y` (concatenated along dim=1)
    Hout = (H + 2 * padding - K) // stride + 1
    Wout = (W + 2 * padding - K) // stride + 1

    key = jax.random.PRNGKey(0)
    kx, ky, kdw, kpw = jax.random.split(key, 4)
    x = jax.random.normal(kx, (N, Cin, H, W), jnp.float32)
    y = jax.random.normal(ky, (N, Cy, Hout, Wout), jnp.float32)
    # Deterministic "Kaiming-ish" init matching the PyTorch parameter shapes.
    w_dw = jax.random.normal(kdw, (Cin, 1, K, K), jnp.float32) * (1.0 / (K * K)) ** 0.5
    w_pw = jax.random.normal(kpw, (Cout, Cin, 1, 1), jnp.float32) * (1.0 / Cin) ** 0.5

    ref_out, ref_cat = _reference_forward(x, y, w_dw, w_pw, stride=stride, padding=padding)

    # --- primary (bf16 MXU) path ---
    fwd = jax.jit(functools.partial(dsc2d_forward, stride=stride, padding=padding))
    out, cat = fwd(x, y, w_dw, w_pw)
    jax.block_until_ready((out, cat))
    assert out.shape == (N, Cout, Hout, Wout)
    assert cat.shape == (N, Cout + Cy, Hout, Wout)
    # bf16 operands (f32 accumulation) -> loosened tolerance vs. the f32 reference.
    assert jnp.allclose(out, ref_out, atol=3e-2, rtol=3e-2)
    assert jnp.allclose(cat, ref_cat, atol=3e-2, rtol=3e-2)

    # --- strict correctness check of the same kernel in f32 ---
    fwd32 = jax.jit(functools.partial(dsc2d_forward, stride=stride, padding=padding,
                                      compute_dtype=jnp.float32))
    out32, cat32 = fwd32(x, y, w_dw, w_pw)
    jax.block_until_ready((out32, cat32))
    assert jnp.allclose(out32, ref_out, atol=1e-4, rtol=1e-4)
    assert jnp.allclose(cat32, ref_cat, atol=1e-4, rtol=1e-4)

    print("KERNEL_OK")
</pallas_src>

<mosaic_0001>
module attributes {stable_mosaic.version = 11 : i64} {
  func.func @kernel(%arg0: i32, %arg1: memref<1x16x342xbf16, #tpu.memory_space<vmem>>, %arg2: memref<8x144xbf16, #tpu.memory_space<vmem>>, %arg3: memref<1x8x288xf32, #tpu.memory_space<vmem>>, %arg4: memref<144x288xbf16, #tpu.memory_space<vmem>>) attributes {dimension_semantics = [#tpu.dimension_semantics<parallel>], iteration_bounds = array<i64: 2>, scalar_prefetch = 0 : i64, scratch_operands = 1 : i64, tpu.core_type = #tpu.core_type<tc>, window_params = [{transform_indices = @transform_0, window_bounds = array<i64: 1, 16, 342>}, {pipeline_mode = #tpu.pipeline_mode<synchronous>, transform_indices = @transform_1, window_bounds = array<i64: 8, 144>}, {transform_indices = @transform_2, window_bounds = array<i64: 1, 8, 288>}]} {
    %c0 = arith.constant 0 : index
    %c0_0 = arith.constant 0 : index
    %0 = vector.load %arg2[%c0, %c0_0] : memref<8x144xbf16, #tpu.memory_space<vmem>>, vector<8x144xbf16>
    %c0_1 = arith.constant 0 : index
    %c0_2 = arith.constant 0 : index
    %c0_3 = arith.constant 0 : index
    %1 = vector.load %arg1[%c0_1, %c0_2, %c0_3] : memref<1x16x342xbf16, #tpu.memory_space<vmem>>, vector<1x16x342xbf16>
    %2 = vector.shape_cast %1 : vector<1x16x342xbf16> to vector<16x342xbf16>
    %3 = vector.extract_strided_slice %2 {offsets = [0, 0], sizes = [16, 288], strides = [1, 1]} : vector<16x342xbf16> to vector<16x288xbf16>
    %c0_4 = arith.constant 0 : index
    %c0_5 = arith.constant 0 : index
    %4 = vector.load %arg4[%c0_4, %c0_5] : memref<144x288xbf16, #tpu.memory_space<vmem>>, vector<16x288xbf16>
    tpu.vector_store %arg4[%c0_4, %c0_5], %3 {strides = array<i32>} : memref<144x288xbf16, #tpu.memory_space<vmem>>, vector<16x288xbf16>,
    %5 = vector.extract_strided_slice %2 {offsets = [0, 1], sizes = [16, 288], strides = [1, 1]} : vector<16x342xbf16> to vector<16x288xbf16>
    %c16 = arith.constant 16 : index
    %c0_6 = arith.constant 0 : index
    %6 = vector.load %arg4[%c16, %c0_6] : memref<144x288xbf16, #tpu.memory_space<vmem>>, vector<16x288xbf16>
    tpu.vector_store %arg4[%c16, %c0_6], %5 {strides = array<i32>} : memref<144x288xbf16, #tpu.memory_space<vmem>>, vector<16x288xbf16>,
    %7 = vector.extract_strided_slice %2 {offsets = [0, 2], sizes = [16, 288], strides = [1, 1]} : vector<16x342xbf16> to vector<16x288xbf16>
    %c32 = arith.constant 32 : index
    %c0_7 = arith.constant 0 : index
    %8 = vector.load %arg4[%c32, %c0_7] : memref<144x288xbf16, #tpu.memory_space<vmem>>, vector<16x288xbf16>
    tpu.vector_store %arg4[%c32, %c0_7], %7 {strides = array<i32>} : memref<144x288xbf16, #tpu.memory_space<vmem>>, vector<16x288xbf16>,
    %9 = vector.extract_strided_slice %2 {offsets = [0, 18], sizes = [16, 288], strides = [1, 1]} : vector<16x342xbf16> to vector<16x288xbf16>
    %c48 = arith.constant 48 : index
    %c0_8 = arith.constant 0 : index
    %10 = vector.load %arg4[%c48, %c0_8] : memref<144x288xbf16, #tpu.memory_space<vmem>>, vector<16x288xbf16>
    tpu.vector_store %arg4[%c48, %c0_8], %9 {strides = array<i32>} : memref<144x288xbf16, #tpu.memory_space<vmem>>, vector<16x288xbf16>,
    %11 = vector.extract_strided_slice %2 {offsets = [0, 19], sizes = [16, 288], strides = [1, 1]} : vector<16x342xbf16> to vector<16x288xbf16>
    %c64 = arith.constant 64 : index
    %c0_9 = arith.constant 0 : index
    %12 = vector.load %arg4[%c64, %c0_9] : memref<144x288xbf16, #tpu.memory_space<vmem>>, vector<16x288xbf16>
    tpu.vector_store %arg4[%c64, %c0_9], %11 {strides = array<i32>} : memref<144x288xbf16, #tpu.memory_space<vmem>>, vector<16x288xbf16>,
    %13 = vector.extract_strided_slice %2 {offsets = [0, 20], sizes = [16, 288], strides = [1, 1]} : vector<16x342xbf16> to vector<16x288xbf16>
    %c80 = arith.constant 80 : index
    %c0_10 = arith.constant 0 : index
    %14 = vector.load %arg4[%c80, %c0_10] : memref<144x288xbf16, #tpu.memory_space<vmem>>, vector<16x288xbf16>
    tpu.vector_store %arg4[%c80, %c0_10], %13 {strides = array<i32>} : memref<144x288xbf16, #tpu.memory_space<vmem>>, vector<16x288xbf16>,
    %15 = vector.extract_strided_slice %2 {offsets = [0, 36], sizes = [16, 288], strides = [1, 1]} : vector<16x342xbf16> to vector<16x288xbf16>
    %c96 = arith.constant 96 : index
    %c0_11 = arith.constant 0 : index
    %16 = vector.load %arg4[%c96, %c0_11] : memref<144x288xbf16, #tpu.memory_space<vmem>>, vector<16x288xbf16>
    tpu.vector_store %arg4[%c96, %c0_11], %15 {strides = array<i32>} : memref<144x288xbf16, #tpu.memory_space<vmem>>, vector<16x288xbf16>,
    %17 = vector.extract_strided_slice %2 {offsets = [0, 37], sizes = [16, 288], strides = [1, 1]} : vector<16x342xbf16> to vector<16x288xbf16>
    %c112 = arith.constant 112 : index
    %c0_12 = arith.constant 0 : index
    %18 = vector.load %arg4[%c112, %c0_12] : memref<144x288xbf16, #tpu.memory_space<vmem>>, vector<16x288xbf16>
    tpu.vector_store %arg4[%c112, %c0_12], %17 {strides = array<i32>} : memref<144x288xbf16, #tpu.memory_space<vmem>>, vector<16x288xbf16>,
    %19 = vector.extract_strided_slice %2 {offsets = [0, 38], sizes = [16, 288], strides = [1, 1]} : vector<16x342xbf16> to vector<16x288xbf16>
    %c128 = arith.constant 128 : index
    %c0_13 = arith.constant 0 : index
    %20 = vector.load %arg4[%c128, %c0_13] : memref<144x288xbf16, #tpu.memory_space<vmem>>, vector<16x288xbf16>
    tpu.vector_store %arg4[%c128, %c0_13], %19 {strides = array<i32>} : memref<144x288xbf16, #tpu.memory_space<vmem>>, vector<16x288xbf16>,
    %c0_14 = arith.constant 0 : index
    %c0_15 = arith.constant 0 : index
    %21 = vector.load %arg4[%c0_14, %c0_15] : memref<144x288xbf16, #tpu.memory_space<vmem>>, vector<144x288xbf16>
    %cst = arith.constant dense<0.000000e+00> : vector<8x288xf32>
    %22 = tpu.matmul %0, %21, %cst {dimension_numbers = #tpu.dot_dimension_numbers<[1], [0], [0], [1], [0, 0, 1, 1], [], []>} : vector<8x144xbf16>, vector<144x288xbf16>, vector<8x288xf32> -> vector<8x288xf32>
    %c0_16 = arith.constant 0 : index
    %c0_17 = arith.constant 0 : index
    %c0_18 = arith.constant 0 : index
    %23 = vector.load %arg3[%c0_16, %c0_17, %c0_18] : memref<1x8x288xf32, #tpu.memory_space<vmem>>, vector<1x8x288xf32>
    %24 = vector.shape_cast %23 : vector<1x8x288xf32> to vector<8x288xf32>
    %25 = vector.shape_cast %22 : vector<8x288xf32> to vector<1x8x288xf32>
    tpu.vector_store %arg3[%c0_16, %c0_17, %c0_18], %25 {strides = array<i32>} : memref<1x8x288xf32, #tpu.memory_space<vmem>>, vector<1x8x288xf32>,
    return
  }
  func.func @transform_0(%arg0: i32) -> (i32, i32, i32) {
    %c0_i32 = arith.constant 0 : i32
    %c0_i32_0 = arith.constant 0 : i32
    %c0_i32_1 = arith.constant 0 : i32
    return %arg0, %c0_i32, %c0_i32_0 : i32, i32, i32
  }
  func.func @transform_1(%arg0: i32) -> (i32, i32) {
    %c0_i32 = arith.constant 0 : i32
    %c0_i32_0 = arith.constant 0 : i32
    %c0_i32_1 = arith.constant 0 : i32
    return %c0_i32, %c0_i32_0 : i32, i32
  }
  func.func @transform_2(%arg0: i32) -> (i32, i32, i32) {
    %c0_i32 = arith.constant 0 : i32
    %c0_i32_0 = arith.constant 0 : i32
    %c0_i32_1 = arith.constant 0 : i32
    return %arg0, %c0_i32, %c0_i32_0 : i32, i32, i32
  }
}

</mosaic_0001>

<llo_original>
// kernel: dsc2d_forward.1
$region0: #{dsc2d_forward.1}
  #allocation0 [shape = 'u32[]', space=smem, size = 0x4, offset = 0x4, fixed_abs, tag = 'smem constant byte address 0x4 - core index']
  #allocation1 [shape = 'u32[144,128]{1,0:T(1,128)}', space=vmem, size = 0x12000, scoped, tag = 'internal scratch']
  #allocation2 [shape = 'bf16[144,288]{1,0:T(8,128)(2,1)}', space=vmem, size = 0x1b000, scoped, tag = 'scratch operand']
  %s0 = inlined_call_operand.vmem [shape: bf16[2,16,342], index: 0, kind: input, shape index: {}]
  %s1 = inlined_call_operand.vmem [shape: bf16[8,144], index: 1, kind: input, shape index: {}]
  %s2 = inlined_call_operand.vmem [shape: f32[2,8,288], index: 2, kind: output, shape index: {}]
  %s3 = sld [smem:[#allocation0]]
  $region41: #{dsc2d_forward.1} parent=0
    _
  %s5 = ssub.s32 1, %s3
  %s6 = scalar_select 0, %s5, %s3
  loop: start=0, step=1, limit=4
  $region2: #{dsc2d_forward.1} parent=0 // loop_pre_header
    _
  $region3: #{dsc2d_forward.1} parent=0 // loop_header
    %s8 = sphi 0, %s12
    %p9 = scmp.ge.s32.totalorder %s8, 4
    %s18 = sphi 0, %s20
    %s21 = sphi 0, %s18
    %s22 = sphi 0, %s21
    %s38 = sphi 0, %s22
    %s42 = sphi 0, %s42
    %s44 = sphi 0, %s42
    %s45 = sphi 0, %s44
    %s59 = sphi 0, %s45
    %s65 = sphi 0, %s67
    %s68 = sphi 0, %s65
    %s69 = sphi 0, %s68
    %s85 = sphi 0, %s69
  $region4: #{dsc2d_forward.1} parent=0 // loop_header_branch
    %11 = sbr.rel (%p9) target = $region8
  $region5: #{dsc2d_forward.1} parent=0 // loop_body
    %s13 = ssub.s32 %s8, 1
    %s14 = ssub.s32 %s8, 2
    %s15 = sadd.s32 %s8, 1
    %s16 = ssub.s32 %s8, %s15
    %p17 = scmp.eq.s32.totalorder %s16, 0
    %s19 = sadd.s32 %s18, 1
    %s20 = scalar_select %p17, %s18, %s19
    %p23 = pneg %p17
    %p24 = scmp.eq.s32.totalorder %s8, 1
    %p25 = por %p23, %p24
    %p26 = scmp.ne.s32.totalorder %s18, %s21
    %p27 = scmp.eq.s32.totalorder %s8, 0
    %p28 = por %p26, %p27
    %p29 = scmp.ne.s32.totalorder %s18, %s21
    %p30 = scmp.eq.s32.totalorder %s13, 1
    %p31 = por %p29, %p30
    %p32 = scmp.ne.s32.totalorder %s21, %s22
    %p33 = scmp.eq.s32.totalorder %s13, 0
    %p34 = por %p32, %p33
    %p35 = scmp.ne.s32.totalorder %s21, %s22
    %p36 = scmp.eq.s32.totalorder %s14, 1
    %p37 = por %p35, %p36
    %p39 = scmp.ne.s32.totalorder %s22, %s38
    %p40 = scmp.eq.s32.totalorder %s14, 0
    %p41 = por %p39, %p40
    %s43 = sadd.s32 %s42, 1
    %p46 = scmp.eq.s32.totalorder %s8, 1
    %p47 = scmp.ne.s32.totalorder %s42, %s44
    %p48 = scmp.eq.s32.totalorder %s8, 0
    %p49 = por %p47, %p48
    %p50 = scmp.ne.s32.totalorder %s42, %s44
    %p51 = scmp.eq.s32.totalorder %s13, 1
    %p52 = por %p50, %p51
    %p53 = scmp.ne.s32.totalorder %s44, %s45
    %p54 = scmp.eq.s32.totalorder %s13, 0
    %p55 = por %p53, %p54
    %p56 = scmp.ne.s32.totalorder %s44, %s45
    %p57 = scmp.eq.s32.totalorder %s14, 1
    %p58 = por %p56, %p57
    %p60 = scmp.ne.s32.totalorder %s45, %s59
    %p61 = scmp.eq.s32.totalorder %s14, 0
    %p62 = por %p60, %p61
    %s63 = ssub.s32 %s8, %s15
    %p64 = scmp.eq.s32.totalorder %s63, 0
    %s66 = sadd.s32 %s65, 1
    %s67 = scalar_select %p64, %s65, %s66
    %p70 = pneg %p64
    %p71 = scmp.eq.s32.totalorder %s8, 1
    %p72 = por %p70, %p71
    %p73 = scmp.ne.s32.totalorder %s65, %s68
    %p74 = scmp.eq.s32.totalorder %s8, 0
    %p75 = por %p73, %p74
    %p76 = scmp.ne.s32.totalorder %s65, %s68
    %p77 = scmp.eq.s32.totalorder %s13, 1
    %p78 = por %p76, %p77
    %p79 = scmp.ne.s32.totalorder %s68, %s69
    %p80 = scmp.eq.s32.totalorder %s13, 0
    %p81 = por %p79, %p80
    %p82 = scmp.ne.s32.totalorder %s68, %s69
    %p83 = scmp.eq.s32.totalorder %s14, 1
    %p84 = por %p82, %p83
    %p86 = scmp.ne.s32.totalorder %s69, %s85
    %p87 = scmp.eq.s32.totalorder %s14, 0
    %p88 = por %p86, %p87
    %p89 = scmp.le.s32.totalorder 1, %s8
    %p90 = scmp.lt.s32.totalorder %s8, 3
    %p91 = pnand %p89, %p90
    %p92 = pneg %p91
    // Predicated region
    $region9: #{dsc2d_forward.1} parent=5 // pred_check
      _
    $region10: #{dsc2d_forward.1} parent=5 // pred_check_branch
      %94 = sbr.rel (%p91) target = $region12
    $region11: #{dsc2d_forward.1} parent=5 // pred_region
      %s95 = ssub.s32 %s8, 1
      // Predicated region
      $region13: #{dsc2d_forward.1} parent=11 // pred_check
        %p96 = pneg %p55
      $region14: #{dsc2d_forward.1} parent=11 // pred_check_branch
        %98 = sbr.rel (%p96) target = $region16
      $region15: #{dsc2d_forward.1} parent=11 // pred_region
        _
      $region16: #{dsc2d_forward.1} parent=11 // pred_fallthru
        _
    $region12: #{dsc2d_forward.1} parent=5 // pred_fallthru
      _
    %p99 = scmp.lt.s32.totalorder %s8, 2
    // Predicated region
    $region17: #{dsc2d_forward.1} parent=5 // pred_check
      %p100 = pneg %p99
    $region18: #{dsc2d_forward.1} parent=5 // pred_check_branch
      %102 = sbr.rel (%p100) target = $region20
    $region19: #{dsc2d_forward.1} parent=5 // pred_region
      // Predicated region
      $region21: #{dsc2d_forward.1} parent=19 // pred_check
        %p103 = pneg %p28
      $region22: #{dsc2d_forward.1} parent=19 // pred_check_branch
        %105 = sbr.rel (%p103) target = $region24
      $region23: #{dsc2d_forward.1} parent=19 // pred_region
        %p106 = scmp.lt.s32.totalorder %s8, 1
        %s107 = scalar_select %p106, %s8, 1
        %s108 = smul.addr %s107, 6
        %s109 = smul.addr %s108, 4
        %s110 = scalar_lea.vmem %s0, %s109
      $region24: #{dsc2d_forward.1} parent=19 // pred_fallthru
        _
    $region20: #{dsc2d_forward.1} parent=5 // pred_fallthru
      _
    %p111 = scmp.le.s32.totalorder 1, %s8
    %p112 = scmp.lt.s32.totalorder %s8, 3
    %p113 = pnand %p111, %p112
    %p114 = pneg %p113
    // Predicated region
    $region25: #{dsc2d_forward.1} parent=5 // pred_check
      _
    $region26: #{dsc2d_forward.1} parent=5 // pred_check_branch
      %116 = sbr.rel (%p113) target = $region28
    $region27: #{dsc2d_forward.1} parent=5 // pred_region
      %s117 = ssub.s32 %s8, 1
      %p118 = scmp.lt.s32.totalorder %s13, 1
      %s119 = scalar_select %p118, %s13, 1
      %s120 = smul.addr %s119, 6
      %s121 = smul.addr %s120, 4
      %s122 = scalar_lea.vmem %s0, %s121
      %p123 = pneg %p34
      %p124 = pneg %p31
      %p125 = pneg %p55
      %p126 = pneg %p52
      %p127 = pneg %p81
      %p128 = pneg %p78
      %p129 = scmp.lt.s32.totalorder %s13, 1
      %s130 = scalar_select %p129, %s13, 1
      %s131 = smul.addr %s130, 3
      %s132 = smul.addr %s131, 8
      %s133 = scalar_lea.vmem %s2, %s132
      %p134 = scmp.lt.s32.totalorder %s13, 1
      %s135 = scalar_select %p134, %s13, 1
      %s136 = smul.addr %s135, 6
      %s137 = smul.addr %s136, 4
      %s138 = scalar_lea.vmem %s0, %s137
      %p139 = scmp.lt.s32.totalorder %s13, 1
      %s140 = scalar_select %p139, %s13, 1
      %s141 = smul.addr %s140, 3
      %s142 = smul.addr %s141, 8
      %s143 = scalar_lea.vmem %s2, %s142
      %v145 = vld [vmem:[%s1] sm:$0xff]
      %v146 = vld [vmem:[%s138] sm:$0xff]
      %v147 = vld [vmem:[%s138 + $0x8] sm:$0xf]
      %v148 = vld [vmem:[%s138 + $0xc] sm:$0xff]
      %v149 = vld [vmem:[%s138 + $0x14] sm:$0xf]
      %150 = vst [vmem:[#allocation2] sm:$0xff] %v146
      %vm151 = vcmask 257024
      %152 = vst.msk [vmem:[#allocation2 + $0x8] sm:$0xf] %vm151, %v147
      %153 = vst [vmem:[#allocation2 + $0xc] sm:$0xff] %v148
      %154 = vst.msk [vmem:[#allocation2 + $0x14] sm:$0xf] %vm151, %v149
      %159 = vrot.lane.b32.xlu0 %v146, 127
      %v160 = vpop.permute.xlu0 %159
      %161 = vrot.lane.b32.xlu0 %v147, 127
      %v162 = vpop.permute.xlu0 %161
      %163 = vrot.lane.b32.xlu0 %v148, 127
      %v164 = vpop.permute.xlu0 %163
      %165 = vrot.lane.b32.xlu0 %v149, 127
      %v166 = vpop.permute.xlu0 %165
      %v167 = vrot.slane %v160, 4
      %v168 = vrot.slane %v162, 4
      %v169 = vrot.slane %v164, 4
      %v170 = vrot.slane %v166, 4
      %vm171 = vcmask 1043456
      %v172 = vsel %vm171, %v167, %v168
      %vm173 = vcmask 1039360
      %v174 = vsel %vm173, %v160, %v172
      %v175 = vsel %vm171, %v169, %v170
      %v176 = vsel %vm173, %v164, %v175
      %181 = vst [vmem:[#allocation2 + $0x18] sm:$0xff] %v174
      %182 = vst.msk [vmem:[#allocation2 + $0x20] sm:$0xf] %vm151, %v162
      %183 = vst [vmem:[#allocation2 + $0x24] sm:$0xff] %v176
      %184 = vst.msk [vmem:[#allocation2 + $0x2c] sm:$0xf] %vm151, %v166
      %185 = vrot.lane.b32.xlu0 %v146, 126
      %v186 = vpop.permute.xlu0 %185
      %187 = vrot.lane.b32.xlu0 %v147, 126
      %v188 = vpop.permute.xlu0 %187
      %189 = vrot.lane.b32.xlu0 %v148, 126
      %v190 = vpop.permute.xlu0 %189
      %191 = vrot.lane.b32.xlu0 %v149, 126
      %v192 = vpop.permute.xlu0 %191
      %v193 = vrot.slane %v186, 4
      %v194 = vrot.slane %v188, 4
      %v195 = vrot.slane %v190, 4
      %v196 = vrot.slane %v192, 4
      %v197 = vsel %vm171, %v193, %v194
      %vm198 = vcmask 1031168
      %v199 = vsel %vm198, %v186, %v197
      %v200 = vsel %vm171, %v195, %v196
      %v201 = vsel %vm198, %v190, %v200
      %206 = vst [vmem:[#allocation2 + $0x30] sm:$0xff] %v199
      %207 = vst.msk [vmem:[#allocation2 + $0x38] sm:$0xf] %vm151, %v188
      %208 = vst [vmem:[#allocation2 + $0x3c] sm:$0xff] %v201
      %209 = vst.msk [vmem:[#allocation2 + $0x44] sm:$0xf] %vm151, %v192
      %210 = vrot.lane.b32.xlu0 %v146, 110
      %v211 = vpop.permute.xlu0 %210
      %212 = vrot.lane.b32.xlu0 %v147, 110
      %v213 = vpop.permute.xlu0 %212
      %214 = vrot.lane.b32.xlu0 %v148, 110
      %v215 = vpop.permute.xlu0 %214
      %216 = vrot.lane.b32.xlu0 %v149, 110
      %v217 = vpop.permute.xlu0 %216
      %v218 = vrot.slane %v211, 4
      %v219 = vrot.slane %v213, 4
      %v220 = vrot.slane %v215, 4
      %v221 = vrot.slane %v217, 4
      %v222 = vsel %vm171, %v218, %v219
      %vm223 = vcmask 900096
      %v224 = vsel %vm223, %v211, %v222
      %v225 = vsel %vm171, %v220, %v221
      %v226 = vsel %vm223, %v215, %v225
      %231 = vst [vmem:[#allocation2 + $0x48] sm:$0xff] %v224
      %232 = vst.msk [vmem:[#allocation2 + $0x50] sm:$0xf] %vm151, %v213
      %233 = vst [vmem:[#allocation2 + $0x54] sm:$0xff] %v226
      %234 = vst.msk [vmem:[#allocation2 + $0x5c] sm:$0xf] %vm151, %v217
      %235 = vrot.lane.b32.xlu0 %v146, 109
      %v236 = vpop.permute.xlu0 %235
      %237 = vrot.lane.b32.xlu0 %v147, 109
      %v238 = vpop.permute.xlu0 %237
      %239 = vrot.lane.b32.xlu0 %v148, 109
      %v240 = vpop.permute.xlu0 %239
      %241 = vrot.lane.b32.xlu0 %v149, 109
      %v242 = vpop.permute.xlu0 %241
      %v243 = vrot.slane %v236, 4
      %v244 = vrot.slane %v238, 4
      %v245 = vrot.slane %v240, 4
      %v246 = vrot.slane %v242, 4
      %v247 = vsel %vm171, %v243, %v244
      %vm248 = vcmask 891904
      %v249 = vsel %vm248, %v236, %v247
      %v250 = vsel %vm171, %v245, %v246
      %v251 = vsel %vm248, %v240, %v250
      %256 = vst [vmem:[#allocation2 + $0x60] sm:$0xff] %v249
      %257 = vst.msk [vmem:[#allocation2 + $0x68] sm:$0xf] %vm151, %v238
      %258 = vst [vmem:[#allocation2 + $0x6c] sm:$0xff] %v251
      %259 = vst.msk [vmem:[#allocation2 + $0x74] sm:$0xf] %vm151, %v242
      %260 = vrot.lane.b32.xlu0 %v146, 108
      %v261 = vpop.permute.xlu0 %260
      %262 = vrot.lane.b32.xlu0 %v147, 108
      %v263 = vpop.permute.xlu0 %262
      %264 = vrot.lane.b32.xlu0 %v148, 108
      %v265 = vpop.permute.xlu0 %264
      %266 = vrot.lane.b32.xlu0 %v149, 108
      %v267 = vpop.permute.xlu0 %266
      %v268 = vrot.slane %v261, 4
      %v269 = vrot.slane %v263, 4
      %v270 = vrot.slane %v265, 4
      %v271 = vrot.slane %v267, 4
      %v272 = vsel %vm171, %v268, %v269
      %vm273 = vcmask 883712
      %v274 = vsel %vm273, %v261, %v272
      %v275 = vsel %vm171, %v270, %v271
      %v276 = vsel %vm273, %v265, %v275
      %281 = vst [vmem:[#allocation2 + $0x78] sm:$0xff] %v274
      %282 = vst.msk [vmem:[#allocation2 + $0x80] sm:$0xf] %vm151, %v263
      %283 = vst [vmem:[#allocation2 + $0x84] sm:$0xff] %v276
      %284 = vst.msk [vmem:[#allocation2 + $0x8c] sm:$0xf] %vm151, %v267
      %285 = vrot.lane.b32.xlu0 %v146, 92
      %v286 = vpop.permute.xlu0 %285
      %287 = vrot.lane.b32.xlu0 %v147, 92
      %v288 = vpop.permute.xlu0 %287
      %289 = vrot.lane.b32.xlu0 %v148, 92
      %v290 = vpop.permute.xlu0 %289
      %291 = vrot.lane.b32.xlu0 %v149, 92
      %v292 = vpop.permute.xlu0 %291
      %v293 = vrot.slane %v286, 4
      %v294 = vrot.slane %v288, 4
      %v295 = vrot.slane %v290, 4
      %v296 = vrot.slane %v292, 4
      %v297 = vsel %vm171, %v293, %v294
      %vm298 = vcmask 752640
      %v299 = vsel %vm298, %v286, %v297
      %v300 = vsel %vm171, %v295, %v296
      %v301 = vsel %vm298, %v290, %v300
      %306 = vst [vmem:[#allocation2 + $0x90] sm:$0xff] %v299
      %307 = vst.msk [vmem:[#allocation2 + $0x98] sm:$0xf] %vm151, %v288
      %308 = vst [vmem:[#allocation2 + $0x9c] sm:$0xff] %v301
      %309 = vst.msk [vmem:[#allocation2 + $0xa4] sm:$0xf] %vm151, %v292
      %310 = vrot.lane.b32.xlu0 %v146, 91
      %v311 = vpop.permute.xlu0 %310
      %312 = vrot.lane.b32.xlu0 %v147, 91
      %v313 = vpop.permute.xlu0 %312
      %314 = vrot.lane.b32.xlu0 %v148, 91
      %v315 = vpop.permute.xlu0 %314
      %316 = vrot.lane.b32.xlu0 %v149, 91
      %v317 = vpop.permute.xlu0 %316
      %v318 = vrot.slane %v311, 4
      %v319 = vrot.slane %v313, 4
      %v320 = vrot.slane %v315, 4
      %v321 = vrot.slane %v317, 4
      %v322 = vsel %vm171, %v318, %v319
      %vm323 = vcmask 744448
      %v324 = vsel %vm323, %v311, %v322
      %v325 = vsel %vm171, %v320, %v321
      %v326 = vsel %vm323, %v315, %v325
      %331 = vst [vmem:[#allocation2 + $0xa8] sm:$0xff] %v324
      %332 = vst.msk [vmem:[#allocation2 + $0xb0] sm:$0xf] %vm151, %v313
      %333 = vst [vmem:[#allocation2 + $0xb4] sm:$0xff] %v326
      %334 = vst.msk [vmem:[#allocation2 + $0xbc] sm:$0xf] %vm151, %v317
      %335 = vrot.lane.b32.xlu0 %v146, 90
      %v336 = vpop.permute.xlu0 %335
      %337 = vrot.lane.b32.xlu0 %v147, 90
      %v338 = vpop.permute.xlu0 %337
      %339 = vrot.lane.b32.xlu0 %v148, 90
      %v340 = vpop.permute.xlu0 %339
      %341 = vrot.lane.b32.xlu0 %v149, 90
      %v342 = vpop.permute.xlu0 %341
      %v343 = vrot.slane %v336, 4
      %v344 = vrot.slane %v338, 4
      %v345 = vrot.slane %v340, 4
      %v346 = vrot.slane %v342, 4
      %v347 = vsel %vm171, %v343, %v344
      %vm348 = vcmask 736256
      %v349 = vsel %vm348, %v336, %v347
      %v350 = vsel %vm171, %v345, %v346
      %v351 = vsel %vm348, %v340, %v350
      %356 = vst [vmem:[#allocation2 + $0xc0] sm:$0xff] %v349
      %357 = vst.msk [vmem:[#allocation2 + $0xc8] sm:$0xf] %vm151, %v338
      %358 = vst [vmem:[#allocation2 + $0xcc] sm:$0xff] %v351
      %359 = vst.msk [vmem:[#allocation2 + $0xd4] sm:$0xf] %vm151, %v342
      %v360 = vld [vmem:[#allocation2] sm:$0xff]
      %v361 = vld [vmem:[#allocation2 + $0x8] sm:$0xf]
      %v362 = vld [vmem:[#allocation2 + $0xc] sm:$0xff]
      %v363 = vld [vmem:[#allocation2 + $0x14] sm:$0xf]
      %v364 = vld [vmem:[#allocation2 + $0x18] sm:$0xff]
      %v365 = vld [vmem:[#allocation2 + $0x20] sm:$0xf]
      %v366 = vld [vmem:[#allocation2 + $0x24] sm:$0xff]
      %v367 = vld [vmem:[#allocation2 + $0x2c] sm:$0xf]
      %v368 = vld [vmem:[#allocation2 + $0x30] sm:$0xff]
      %v369 = vld [vmem:[#allocation2 + $0x38] sm:$0xf]
      %v370 = vld [vmem:[#allocation2 + $0x3c] sm:$0xff]
      %v371 = vld [vmem:[#allocation2 + $0x44] sm:$0xf]
      %v372 = vld [vmem:[#allocation2 + $0x48] sm:$0xff]
      %v373 = vld [vmem:[#allocation2 + $0x50] sm:$0xf]
      %v374 = vld [vmem:[#allocation2 + $0x54] sm:$0xff]
      %v375 = vld [vmem:[#allocation2 + $0x5c] sm:$0xf]
      %v376 = vld [vmem:[#allocation2 + $0x60] sm:$0xff]
      %v377 = vld [vmem:[#allocation2 + $0x68] sm:$0xf]
      %v378 = vld [vmem:[#allocation2 + $0x6c] sm:$0xff]
      %v379 = vld [vmem:[#allocation2 + $0x74] sm:$0xf]
      %v380 = vld [vmem:[#allocation2 + $0x78] sm:$0xff]
      %v381 = vld [vmem:[#allocation2 + $0x80] sm:$0xf]
      %v382 = vld [vmem:[#allocation2 + $0x84] sm:$0xff]
      %v383 = vld [vmem:[#allocation2 + $0x8c] sm:$0xf]
      %v384 = vld [vmem:[#allocation2 + $0x90] sm:$0xff]
      %v385 = vld [vmem:[#allocation2 + $0x98] sm:$0xf]
      %v386 = vld [vmem:[#allocation2 + $0x9c] sm:$0xff]
      %v387 = vld [vmem:[#allocation2 + $0xa4] sm:$0xf]
      %v388 = vld [vmem:[#allocation2 + $0xa8] sm:$0xff]
      %v389 = vld [vmem:[#allocation2 + $0xb0] sm:$0xf]
      %v390 = vld [vmem:[#allocation2 + $0xb4] sm:$0xff]
      %v391 = vld [vmem:[#allocation2 + $0xbc] sm:$0xf]
      %v392 = vld [vmem:[#allocation2 + $0xc0] sm:$0xff]
      %v393 = vld [vmem:[#allocation2 + $0xc8] sm:$0xf]
      %v394 = vld [vmem:[#allocation2 + $0xcc] sm:$0xff]
      %v395 = vld [vmem:[#allocation2 + $0xd4] sm:$0xf]
      %v397 = vunpack.c.l.b16 %v145
      %v398 = vunpack.c.h.b16 %v145
      %v399 = vpack.c.b16 %v397, %v397
      %v400 = vpack.c.b16 %v398, %v398
      %v438 = vunpack.c.l.b16 %v360
      %v439 = vunpack.c.h.b16 %v360
      %v440 = vunpack.c.l.b16 %v361
      %v441 = vunpack.c.l.b16 %v362
      %v442 = vunpack.c.h.b16 %v362
      %v443 = vunpack.c.l.b16 %v363
      %v444 = vunpack.c.l.b16 %v364
      %v445 = vunpack.c.h.b16 %v364
      %v446 = vunpack.c.l.b16 %v365
      %v447 = vunpack.c.l.b16 %v366
      %v448 = vunpack.c.h.b16 %v366
      %v449 = vunpack.c.l.b16 %v367
      %v450 = vunpack.c.l.b16 %v368
      %v451 = vunpack.c.h.b16 %v368
      %v452 = vunpack.c.l.b16 %v369
      %v453 = vunpack.c.l.b16 %v370
      %v454 = vunpack.c.h.b16 %v370
      %v455 = vunpack.c.l.b16 %v371
      %v456 = vunpack.c.l.b16 %v372
      %v457 = vunpack.c.h.b16 %v372
      %v458 = vunpack.c.l.b16 %v373
      %v459 = vunpack.c.l.b16 %v374
      %v460 = vunpack.c.h.b16 %v374
      %v461 = vunpack.c.l.b16 %v375
      %v462 = vunpack.c.l.b16 %v376
      %v463 = vunpack.c.h.b16 %v376
      %v464 = vunpack.c.l.b16 %v377
      %v465 = vunpack.c.l.b16 %v378
      %v466 = vunpack.c.h.b16 %v378
      %v467 = vunpack.c.l.b16 %v379
      %v468 = vunpack.c.l.b16 %v380
      %v469 = vunpack.c.h.b16 %v380
      %v470 = vunpack.c.l.b16 %v381
      %v471 = vunpack.c.l.b16 %v382
      %v472 = vunpack.c.h.b16 %v382
      %v473 = vunpack.c.l.b16 %v383
      %v474 = vunpack.c.l.b16 %v384
      %v475 = vunpack.c.h.b16 %v384
      %v476 = vunpack.c.l.b16 %v385
      %v477 = vunpack.c.l.b16 %v386
      %v478 = vunpack.c.h.b16 %v386
      %v479 = vunpack.c.l.b16 %v387
      %v480 = vunpack.c.l.b16 %v388
      %v481 = vunpack.c.h.b16 %v388
      %v482 = vunpack.c.l.b16 %v389
      %v483 = vunpack.c.l.b16 %v390
      %v484 = vunpack.c.h.b16 %v390
      %v485 = vunpack.c.l.b16 %v391
      %v486 = vunpack.c.l.b16 %v392
      %v487 = vunpack.c.h.b16 %v392
      %v488 = vunpack.c.l.b16 %v393
      %v489 = vunpack.c.l.b16 %v394
      %v490 = vunpack.c.h.b16 %v394
      %v491 = vunpack.c.l.b16 %v395
      %v492 = vpack.c.b16 %v441, %v438
      %v493 = vpack.c.b16 %v442, %v439
      %v494 = vpack.c.b16 %v443, %v440
      %v495 = vpack.c.b16 %v447, %v444
      %v496 = vpack.c.b16 %v448, %v445
      %v497 = vpack.c.b16 %v449, %v446
      %v498 = vpack.c.b16 %v453, %v450
      %v499 = vpack.c.b16 %v454, %v451
      %v500 = vpack.c.b16 %v455, %v452
      %v501 = vpack.c.b16 %v459, %v456
      %v502 = vpack.c.b16 %v460, %v457
      %v503 = vpack.c.b16 %v461, %v458
      %v504 = vpack.c.b16 %v465, %v462
      %v505 = vpack.c.b16 %v466, %v463
      %v506 = vpack.c.b16 %v467, %v464
      %v507 = vpack.c.b16 %v471, %v468
      %v508 = vpack.c.b16 %v472, %v469
      %v509 = vpack.c.b16 %v473, %v470
      %v510 = vpack.c.b16 %v477, %v474
      %v511 = vpack.c.b16 %v478, %v475
      %v512 = vpack.c.b16 %v479, %v476
      %v513 = vpack.c.b16 %v483, %v480
      %v514 = vpack.c.b16 %v484, %v481
      %v515 = vpack.c.b16 %v485, %v482
      %v516 = vpack.c.b16 %v489, %v486
      %v517 = vpack.c.b16 %v490, %v487
      %v518 = vpack.c.b16 %v491, %v488
      %vm546 = vcmask 130048
      %v548 = vsel %vm546, %v400, 0
      %550 = vmatprep.subr.bf16.mxu0 %v514
      %551 = vmatpush1.bf16.msra.mxu0 %v513
      %552 = vmatprep.subr.bf16.mxu0 %v511
      %553 = vmatpush1.bf16.msra.mxu0 %v510
      %554 = vmatprep.subr.bf16.mxu0 %v508
      %555 = vmatpush1.bf16.msra.mxu0 %v507
      %556 = vmatprep.subr.bf16.mxu0 %v505
      %557 = vmatpush1.bf16.msra.mxu0 %v504
      %558 = vmatprep.subr.bf16.mxu0 %v502
      %559 = vmatpush1.bf16.msra.mxu0 %v501
      %560 = vmatprep.subr.bf16.mxu0 %v499
      %561 = vmatpush1.bf16.msra.mxu0 %v498
      %562 = vmatprep.subr.bf16.mxu0 %v496
      %563 = vmatpush1.bf16.msra.mxu0 %v495
      %564 = vmatprep.subr.bf16.mxu0 %v493
      %565 = vmatpush1.bf16.msra.mxu0 %v492
      %566 = vmatprep.subr.bf16.mxu0 0
      %567 = vmatpush2.bf16.msra.mxu0 0
      %568 = vmatprep.subr.bf16.mxu0 0
      %569 = vmatpush2.bf16.msra.mxu0 0
      %570 = vmatprep.subr.bf16.mxu0 0
      %571 = vmatpush2.bf16.msra.mxu0 0
      %572 = vmatprep.subr.bf16.mxu0 0
      %573 = vmatpush2.bf16.msra.mxu0 0
      %574 = vmatprep.subr.bf16.mxu0 0
      %575 = vmatpush2.bf16.msra.mxu0 0
      %576 = vmatprep.subr.bf16.mxu0 0
      %577 = vmatpush2.bf16.msra.mxu0 0
      %578 = vmatprep.subr.bf16.mxu0 0
      %579 = vmatpush2.bf16.msra.mxu0 0
      %580 = vmatprep.subr.bf16.mxu0 %v517
      %581 = vmatpush2.bf16.msra.mxu0 %v516
      %582 = vmatprep.mubr.bf16.mxu0 %v548
      %583 = vmatmul.mubr.bf16.gmra.mxu0 %v399
      %v584 = vpop.f32.mrf.mxu0
      %v585 = vadd.f32 0.0, %v584
      %v586 = vpop.f32.mrf.mxu0
      %v587 = vadd.f32 0.0, %v586
      %v588 = vpop.f32.mrf.mxu0
      %v589 = vpop.f32.mrf.mxu0
      %590 = vdwg.mxu0
      %591 = vmatprep.subr.bf16.mxu0 0
      %592 = vmatpush1.bf16.msra.mxu0 %v515
      %593 = vmatprep.subr.bf16.mxu0 0
      %594 = vmatpush1.bf16.msra.mxu0 %v512
      %595 = vmatprep.subr.bf16.mxu0 0
      %596 = vmatpush1.bf16.msra.mxu0 %v509
      %597 = vmatprep.subr.bf16.mxu0 0
      %598 = vmatpush1.bf16.msra.mxu0 %v506
      %599 = vmatprep.subr.bf16.mxu0 0
      %600 = vmatpush1.bf16.msra.mxu0 %v503
      %601 = vmatprep.subr.bf16.mxu0 0
      %602 = vmatpush1.bf16.msra.mxu0 %v500
      %603 = vmatprep.subr.bf16.mxu0 0
      %604 = vmatpush1.bf16.msra.mxu0 %v497
      %605 = vmatprep.subr.bf16.mxu0 0
      %606 = vmatpush1.bf16.msra.mxu0 %v494
      %607 = vmatprep.subr.bf16.mxu0 0
      %608 = vmatpush2.bf16.msra.mxu0 0
      %609 = vmatprep.subr.bf16.mxu0 0
      %610 = vmatpush2.bf16.msra.mxu0 0
      %611 = vmatprep.subr.bf16.mxu0 0
      %612 = vmatpush2.bf16.msra.mxu0 0
      %613 = vmatprep.subr.bf16.mxu0 0
      %614 = vmatpush2.bf16.msra.mxu0 0
      %615 = vmatprep.subr.bf16.mxu0 0
      %616 = vmatpush2.bf16.msra.mxu0 0
      %617 = vmatprep.subr.bf16.mxu0 0
      %618 = vmatpush2.bf16.msra.mxu0 0
      %619 = vmatprep.subr.bf16.mxu0 0
      %620 = vmatpush2.bf16.msra.mxu0 0
      %621 = vmatprep.subr.bf16.mxu0 0
      %622 = vmatpush2.bf16.msra.mxu0 %v518
      %623 = vmatprep.mubr.bf16.mxu0 %v548
      %624 = vmatmul.mubr.bf16.gmra.mxu0 %v399
      %v625 = vpop.f32.mrf.mxu0
      %v626 = vadd.f32 0.0, %v625
      %v627 = vpop.f32.mrf.mxu0
      %v628 = vpop.f32.mrf.mxu0
      %v629 = vpop.f32.mrf.mxu0
      %630 = vdwg.mxu0
      %631 = vst [vmem:[%s143] sm:$0xff] %v585
      %632 = vst [vmem:[%s143 + $0x8] sm:$0xff] %v587
      %vm633 = vcmask 261120
      %634 = vst.msk [vmem:[%s143 + $0x10] sm:$0xff] %vm633, %v626
      %p635 = scmp.lt.s32.totalorder %s13, 1
      %s636 = scalar_select %p635, %s13, 1
      %s637 = smul.addr %s636, 3
      %s638 = smul.addr %s637, 8
      %s639 = scalar_lea.vmem %s2, %s638
      // Predicated region
      $region29: #{dsc2d_forward.1} parent=27 // pred_check
        %p640 = pneg %p78
      $region30: #{dsc2d_forward.1} parent=27 // pred_check_branch
        %642 = sbr.rel (%p640) target = $region32
      $region31: #{dsc2d_forward.1} parent=27 // pred_region
        _
      $region32: #{dsc2d_forward.1} parent=27 // pred_fallthru
        _
    $region28: #{dsc2d_forward.1} parent=5 // pred_fallthru
      _
    %p643 = scmp.le.s32.totalorder 2, %s8
    // Predicated region
    $region33: #{dsc2d_forward.1} parent=5 // pred_check
      %p644 = pneg %p643
    $region34: #{dsc2d_forward.1} parent=5 // pred_check_branch
      %646 = sbr.rel (%p644) target = $region36
    $region35: #{dsc2d_forward.1} parent=5 // pred_region
      %s647 = ssub.s32 %s8, 2
      // Predicated region
      $region37: #{dsc2d_forward.1} parent=35 // pred_check
        %p648 = pneg %p84
      $region38: #{dsc2d_forward.1} parent=35 // pred_check_branch
        %650 = sbr.rel (%p648) target = $region40
      $region39: #{dsc2d_forward.1} parent=35 // pred_region
        %p651 = scmp.lt.s32.totalorder %s14, 1
        %s652 = scalar_select %p651, %s14, 1
        %s653 = smul.addr %s652, 3
        %s654 = smul.addr %s653, 8
        %s655 = scalar_lea.vmem %s2, %s654
      $region40: #{dsc2d_forward.1} parent=35 // pred_fallthru
        _
    $region36: #{dsc2d_forward.1} parent=5 // pred_fallthru
      _
  $region6: #{dsc2d_forward.1} parent=0 // loop_footer
    %s12 = sadd.s32 1, %s8
  $region7: #{dsc2d_forward.1} parent=0 // loop_footer_branch
    %7 = sbr.rel target = $region3
  $region8: #{dsc2d_forward.1} parent=0 // loop_exit
    _

</llo_original>
